<compile_context>
chip_gen: v7x
topology: tpu7x:2x2x1
jax: 0.10.0
libtpu: 0.0.40
codegen_flags: <defaults>
</compile_context>

<pallas_src>
import jax
import jax.numpy as jnp
from jax.experimental import pallas as pl
from jax.experimental.pallas import tpu as pltpu

EPS = 1e-6


def mpnn_kernel(hV_ref, hE_ref, mask_ref,
                w1v_ref, w1e_ref, b1_ref, w2_ref, b2_ref, w3_ref, b3_ref,
                gain_ref, gbias_ref,
                out_ref):
    tm, H = hV_ref.shape
    tmK, C = hE_ref.shape
    K = tmK // tm

    hv = hV_ref[...]                                           # [tm, H] f32

    # --- first Linear of W, split so the h_V half is computed once per node
    #     (instead of K times on a materialized concat):
    #     W1([h_V, h_E]) = h_V @ W1_v + h_E @ W1_e + b1
    tv = jnp.dot(hv.astype(jnp.bfloat16), w1v_ref[...],
                 preferred_element_type=jnp.float32) + b1_ref[...]       # [tm, H]
    te = jnp.dot(hE_ref[...], w1e_ref[...],                              # h_E already bf16
                 preferred_element_type=jnp.float32)                     # [tm*K, H]
    h1 = jnp.maximum(te.reshape(tm, K, H) + tv[:, None, :], 0.0)
    h1 = h1.astype(jnp.bfloat16)                       # bf16 live intermediate -> MXU

    # --- second Linear -> ReLU (bf16 operands, f32 accumulation)
    h2 = jnp.dot(h1.reshape(tmK, H), w2_ref[...],
                 preferred_element_type=jnp.float32) + b2_ref[...]       # [tm*K, H]
    h2 = jnp.maximum(h2, 0.0)

    # --- masked mean over K hoisted ahead of W3 (exact by linearity):
    #     dh = mean_k mask_k*(h2_k @ W3 + b3)
    #        = (1/K) * ((sum_k mask_k*h2_k) @ W3 + b3 * sum_k mask_k)
    m = mask_ref[...]                                          # [tm, K] f32
    s = jnp.sum(h2.reshape(tm, K, H) * m[..., None], axis=1)   # [tm, H] f32
    msum = jnp.sum(m, axis=1, keepdims=True)                   # [tm, 1]
    dh = (jnp.dot(s.astype(jnp.bfloat16), w3_ref[...],
                  preferred_element_type=jnp.float32)
          + b3_ref[...] * msum) * (1.0 / K)                    # [tm, H]

    # --- residual + Normalize (dropout == identity in eval mode)
    y = hv + dh
    mu = jnp.mean(y, axis=-1, keepdims=True)
    # torch.var default is unbiased (divide by H-1)
    var = jnp.sum((y - mu) ** 2, axis=-1, keepdims=True) * (1.0 / (H - 1))
    sigma = jnp.sqrt(var + EPS)
    inv = pl.reciprocal(sigma + EPS, approx=True)              # EUP slot, ~free
    out_ref[...] = gain_ref[...] * (y - mu) * inv + gbias_ref[...]
    # TODO(synk): for H < 128 the final store is lane-masked (H=32 of 128 lanes);
    # production hidden_size=128 is already lane-dense, so no repacking is done here.


def mpnn_layer_pallas(h_V, h_E, mask_attend, params, *, tm=512):
    B, N, H = h_V.shape
    K, C = h_E.shape[2], h_E.shape[3]

    w1, b1, w2, b2, w3, b3, gain, gbias = params
    # Split W1 so the kernel never needs concat(h_V, h_E) materialized in HBM,
    # and cast GEMM weights to bf16 once (accumulation stays f32 in-kernel).
    w1v = w1[:H].astype(jnp.bfloat16)
    w1e = w1[H:].astype(jnp.bfloat16)
    w2b = w2.astype(jnp.bfloat16)
    w3b = w3.astype(jnp.bfloat16)

    M = B * N
    # Row tile: big enough to amortize per-grid-step overhead, but always split
    # into >= 2 balanced tiles so both v7x TensorCores get work; multiple of 8
    # sublanes; capped at `tm` (512 default fits comfortably in VMEM).
    half = ((pl.cdiv(M, 2) + 7) // 8) * 8
    tm = max(8, min(tm, half))
    grid = pl.cdiv(M, tm)

    hV_flat = h_V.reshape(M, H)
    # bf16 h_E halves the dominant HBM stream.  No jnp.pad copy: the last grid
    # block may be ragged — Pallas read-pads it and masks the writeback; all
    # compute is row-local so garbage only reaches discarded output rows
    # (those rows can transiently hold NaN, which is harmless here).
    hE_flat = h_E.reshape(M * K, C).astype(jnp.bfloat16)
    mask_flat = mask_attend.reshape(M, K)

    full = lambda shape: pl.BlockSpec(shape, lambda i: (0, 0))

    flops = 2 * M * (2 * H * H + K * C * H + K * H * H)
    bytes_accessed = (4 * (2 * M * H + M * K) + 2 * M * K * C
                      + 2 * (3 * H * H + C * H) + 4 * 5 * H)
    cost = pl.CostEstimate(flops=flops, transcendentals=2 * M,
                           bytes_accessed=bytes_accessed)

    out = pl.pallas_call(
        mpnn_kernel,
        out_shape=jax.ShapeDtypeStruct((M, H), jnp.float32),
        grid_spec=pltpu.PrefetchScalarGridSpec(
            num_scalar_prefetch=0,
            grid=(grid,),
            in_specs=[
                pl.BlockSpec((tm, H), lambda i: (i, 0)),          # h_V rows
                pl.BlockSpec((tm * K, C), lambda i: (i, 0)),      # h_E rows (node-major, bf16)
                pl.BlockSpec((tm, K), lambda i: (i, 0)),          # mask rows
                full((H, H)), full((C, H)), full((1, H)),         # W1_v, W1_e, b1
                full((H, H)), full((1, H)),                       # W2, b2
                full((H, H)), full((1, H)),                       # W3, b3
                full((1, H)), full((1, H)),                       # gain, bias
            ],
            out_specs=pl.BlockSpec((tm, H), lambda i: (i, 0)),
        ),
        compiler_params=pltpu.CompilerParams(
            dimension_semantics=("parallel",),        # shards row tiles across TCs on v7x
            vmem_limit_bytes=48 * 1024 * 1024,
        ),
        cost_estimate=cost,
    )(hV_flat, hE_flat, mask_flat,
      w1v, w1e, b1, w2b, b2, w3b, b3, gain, gbias)

    return out.reshape(B, N, H)


def init_params(key, num_hidden, num_in):
    """Deterministic PyTorch-Linear-style init (uniform +/- 1/sqrt(fan_in))."""
    H, C = num_hidden, num_in
    ks = jax.random.split(key, 6)

    def linear(kw, kb, fan_in, fan_out):
        bound = 1.0 / jnp.sqrt(fan_in)
        w = jax.random.uniform(kw, (fan_in, fan_out), jnp.float32, -bound, bound)
        b = jax.random.uniform(kb, (1, fan_out), jnp.float32, -bound, bound)
        return w, b

    w1, b1 = linear(ks[0], ks[1], H + C, H)
    w2, b2 = linear(ks[2], ks[3], H, H)
    w3, b3 = linear(ks[4], ks[5], H, H)
    gain = jnp.ones((1, H), jnp.float32)
    gbias = jnp.zeros((1, H), jnp.float32)
    return (w1, b1, w2, b2, w3, b3, gain, gbias)


def mpnn_layer_ref(h_V, h_E, mask_attend, params, matmul_dtype=jnp.float32):
    """Pure-JAX reference mirroring the PyTorch forward (eval mode).

    matmul_dtype=jnp.bfloat16 mirrors the kernel's bf16-operand / f32-accumulate
    GEMMs so the tolerance check isolates genuine bugs, not bf16 rounding.
    """
    w1, b1, w2, b2, w3, b3, gain, gbias = params
    B, N, H = h_V.shape
    K = h_E.shape[2]
    h_V_expand = jnp.broadcast_to(h_V[:, :, None, :], (B, N, K, H))
    h_EV = jnp.concatenate([h_V_expand, h_E], axis=-1)

    def lin(x, w, b):
        return jnp.dot(x.astype(matmul_dtype), w.astype(matmul_dtype),
                       preferred_element_type=jnp.float32) + b[0]

    h = jnp.maximum(lin(h_EV, w1, b1), 0.0)
    h = jnp.maximum(lin(h, w2, b2), 0.0)
    h = lin(h, w3, b3)
    h_message = h * mask_attend[..., None]
    dh = jnp.mean(h_message, axis=-2)
    y = h_V + dh
    mu = jnp.mean(y, axis=-1, keepdims=True)
    var = jnp.sum((y - mu) ** 2, axis=-1, keepdims=True) / (H - 1)
    sigma = jnp.sqrt(var + EPS)
    return gain[0] * (y - mu) / (sigma + EPS) + gbias[0]


if __name__ == "__main__":
    key = jax.random.PRNGKey(0)
    kv, ke, km, kp, kv2, ke2, km2 = jax.random.split(key, 7)

    num_hidden, num_in = 32, 32
    params = init_params(kp, num_hidden, num_in)

    # --- small shape (two balanced tiles, exact division)
    B, N, K = 2, 8, 4
    h_V = jax.random.normal(kv, (B, N, num_hidden), jnp.float32)
    h_E = jax.random.normal(ke, (B, N, K, num_in), jnp.float32)
    mask_attend = (jax.random.uniform(km, (B, N, K)) > 0.3).astype(jnp.float32)

    out = mpnn_layer_pallas(h_V, h_E, mask_attend, params)
    jax.block_until_ready(out)
    ref = mpnn_layer_ref(h_V, h_E, mask_attend, params, matmul_dtype=jnp.bfloat16)
    assert out.shape == (B, N, num_hidden)
    assert jnp.allclose(out, ref, atol=3e-2, rtol=3e-2), "mismatch vs reference (small)"

    # --- larger shape: exercises the multi-tile grid with a ragged last block
    B2, N2, K2 = 2, 101, 8                     # M = 202, tm = 104 -> last block ragged
    h_V2 = jax.random.normal(kv2, (B2, N2, num_hidden), jnp.float32)
    h_E2 = jax.random.normal(ke2, (B2, N2, K2, num_in), jnp.float32)
    mask2 = (jax.random.uniform(km2, (B2, N2, K2)) > 0.3).astype(jnp.float32)

    out2 = mpnn_layer_pallas(h_V2, h_E2, mask2, params)
    jax.block_until_ready(out2)
    ref2 = mpnn_layer_ref(h_V2, h_E2, mask2, params, matmul_dtype=jnp.bfloat16)
    assert out2.shape == (B2, N2, num_hidden)
    assert jnp.allclose(out2, ref2, atol=3e-2, rtol=3e-2), "mismatch vs reference (large)"

    # TODO(synk): the h_V.dim() == h_E.dim() branch (Ws MLP, no neighbor mean) and the
    # rest of Decoder (ComplexFeatures/top-k, GRU, attention, ESM, coarse-graining) are
    # not implemented here; this kernel covers the recurring MPNNLayer hot path.
    print("KERNEL_OK")
</pallas_src>

<mosaic_0001>
module attributes {stable_mosaic.version = 11 : i64} {
  func.func @mpnn_kernel(%arg0: i32, %arg1: memref<8x32xf32, #tpu.memory_space<vmem>>, %arg2: memref<32x32xbf16, #tpu.memory_space<vmem>>, %arg3: memref<8x4xf32, #tpu.memory_space<vmem>>, %arg4: memref<32x32xbf16, #tpu.memory_space<vmem>>, %arg5: memref<32x32xbf16, #tpu.memory_space<vmem>>, %arg6: memref<1x32xf32, #tpu.memory_space<vmem>>, %arg7: memref<32x32xbf16, #tpu.memory_space<vmem>>, %arg8: memref<1x32xf32, #tpu.memory_space<vmem>>, %arg9: memref<32x32xbf16, #tpu.memory_space<vmem>>, %arg10: memref<1x32xf32, #tpu.memory_space<vmem>>, %arg11: memref<1x32xf32, #tpu.memory_space<vmem>>, %arg12: memref<1x32xf32, #tpu.memory_space<vmem>>, %arg13: memref<8x32xf32, #tpu.memory_space<vmem>>) attributes {dimension_semantics = [#tpu.dimension_semantics<parallel>], iteration_bounds = array<i64: 2>, scalar_prefetch = 0 : i64, scratch_operands = 0 : i64, tpu.core_type = #tpu.core_type<tc>, window_params = [{transform_indices = @transform_0, window_bounds = array<i64: 8, 32>}, {transform_indices = @transform_1, window_bounds = array<i64: 32, 32>}, {transform_indices = @transform_2, window_bounds = array<i64: 8, 4>}, {pipeline_mode = #tpu.pipeline_mode<synchronous>, transform_indices = @transform_3, window_bounds = array<i64: 32, 32>}, {pipeline_mode = #tpu.pipeline_mode<synchronous>, transform_indices = @transform_4, window_bounds = array<i64: 32, 32>}, {pipeline_mode = #tpu.pipeline_mode<synchronous>, transform_indices = @transform_5, window_bounds = array<i64: 1, 32>}, {pipeline_mode = #tpu.pipeline_mode<synchronous>, transform_indices = @transform_6, window_bounds = array<i64: 32, 32>}, {pipeline_mode = #tpu.pipeline_mode<synchronous>, transform_indices = @transform_7, window_bounds = array<i64: 1, 32>}, {pipeline_mode = #tpu.pipeline_mode<synchronous>, transform_indices = @transform_8, window_bounds = array<i64: 32, 32>}, {pipeline_mode = #tpu.pipeline_mode<synchronous>, transform_indices = @transform_9, window_bounds = array<i64: 1, 32>}, {pipeline_mode = #tpu.pipeline_mode<synchronous>, transform_indices = @transform_10, window_bounds = array<i64: 1, 32>}, {pipeline_mode = #tpu.pipeline_mode<synchronous>, transform_indices = @transform_11, window_bounds = array<i64: 1, 32>}, {transform_indices = @transform_12, window_bounds = array<i64: 8, 32>}]} {
    %c0 = arith.constant 0 : index
    %c0_0 = arith.constant 0 : index
    %0 = vector.load %arg1[%c0, %c0_0] : memref<8x32xf32, #tpu.memory_space<vmem>>, vector<8x32xf32>
    %1 = arith.truncf %0 : vector<8x32xf32> to vector<8x32xbf16>
    %c0_1 = arith.constant 0 : index
    %c0_2 = arith.constant 0 : index
    %2 = vector.load %arg4[%c0_1, %c0_2] : memref<32x32xbf16, #tpu.memory_space<vmem>>, vector<32x32xbf16>
    %cst = arith.constant dense<0.000000e+00> : vector<8x32xf32>
    %3 = tpu.matmul %1, %2, %cst {dimension_numbers = #tpu.dot_dimension_numbers<[1], [0], [0], [1], [0, 0, 1, 1], [], []>} : vector<8x32xbf16>, vector<32x32xbf16>, vector<8x32xf32> -> vector<8x32xf32>
    %c0_3 = arith.constant 0 : index
    %c0_4 = arith.constant 0 : index
    %4 = vector.load %arg6[%c0_3, %c0_4] : memref<1x32xf32, #tpu.memory_space<vmem>>, vector<1x32xf32>
    %5 = vector.broadcast %4 : vector<1x32xf32> to vector<8x32xf32>
    %6 = arith.addf %3, %5 : vector<8x32xf32>
    %c0_5 = arith.constant 0 : index
    %c0_6 = arith.constant 0 : index
    %7 = vector.load %arg2[%c0_5, %c0_6] : memref<32x32xbf16, #tpu.memory_space<vmem>>, vector<32x32xbf16>
    %c0_7 = arith.constant 0 : index
    %c0_8 = arith.constant 0 : index
    %8 = vector.load %arg5[%c0_7, %c0_8] : memref<32x32xbf16, #tpu.memory_space<vmem>>, vector<32x32xbf16>
    %cst_9 = arith.constant dense<0.000000e+00> : vector<32x32xf32>
    %9 = tpu.matmul %7, %8, %cst_9 {dimension_numbers = #tpu.dot_dimension_numbers<[1], [0], [0], [1], [0, 0, 1, 1], [], []>} : vector<32x32xbf16>, vector<32x32xbf16>, vector<32x32xf32> -> vector<32x32xf32>
    %10 = vector.shape_cast %9 : vector<32x32xf32> to vector<8x4x32xf32>
    %11 = vector.shape_cast %6 : vector<8x32xf32> to vector<8x1x32xf32>
    %12 = vector.broadcast %11 : vector<8x1x32xf32> to vector<8x4x32xf32>
    %13 = arith.addf %10, %12 : vector<8x4x32xf32>
    %cst_10 = arith.constant 0.000000e+00 : f32
    %14 = vector.broadcast %cst_10 : f32 to vector<8x4x32xf32>
    %15 = arith.maximumf %13, %14 : vector<8x4x32xf32>
    %16 = arith.truncf %15 : vector<8x4x32xf32> to vector<8x4x32xbf16>
    %17 = vector.shape_cast %16 : vector<8x4x32xbf16> to vector<32x32xbf16>
    %c0_11 = arith.constant 0 : index
    %c0_12 = arith.constant 0 : index
    %18 = vector.load %arg7[%c0_11, %c0_12] : memref<32x32xbf16, #tpu.memory_space<vmem>>, vector<32x32xbf16>
    %cst_13 = arith.constant dense<0.000000e+00> : vector<32x32xf32>
    %19 = tpu.matmul %17, %18, %cst_13 {dimension_numbers = #tpu.dot_dimension_numbers<[1], [0], [0], [1], [0, 0, 1, 1], [], []>} : vector<32x32xbf16>, vector<32x32xbf16>, vector<32x32xf32> -> vector<32x32xf32>
    %c0_14 = arith.constant 0 : index
    %c0_15 = arith.constant 0 : index
    %20 = vector.load %arg8[%c0_14, %c0_15] : memref<1x32xf32, #tpu.memory_space<vmem>>, vector<1x32xf32>
    %21 = vector.broadcast %20 : vector<1x32xf32> to vector<32x32xf32>
    %22 = arith.addf %19, %21 : vector<32x32xf32>
    %cst_16 = arith.constant 0.000000e+00 : f32
    %23 = vector.broadcast %cst_16 : f32 to vector<32x32xf32>
    %24 = arith.maximumf %22, %23 : vector<32x32xf32>
    %c0_17 = arith.constant 0 : index
    %c0_18 = arith.constant 0 : index
    %25 = vector.load %arg3[%c0_17, %c0_18] : memref<8x4xf32, #tpu.memory_space<vmem>>, vector<8x4xf32>
    %26 = vector.shape_cast %24 : vector<32x32xf32> to vector<8x4x32xf32>
    %27 = vector.shape_cast %25 : vector<8x4xf32> to vector<8x4x1xf32>
    %28 = vector.broadcast %27 : vector<8x4x1xf32> to vector<8x4x32xf32>
    %29 = arith.mulf %26, %28 : vector<8x4x32xf32>
    %cst_19 = arith.constant dense<0.000000e+00> : vector<8x32xf32>
    %30 = vector.multi_reduction <add>, %29, %cst_19 [1] : vector<8x4x32xf32> to vector<8x32xf32>
    %cst_20 = arith.constant dense<0.000000e+00> : vector<8xf32>
    %31 = vector.multi_reduction <add>, %25, %cst_20 [1] : vector<8x4xf32> to vector<8xf32>
    %32 = vector.shape_cast %31 : vector<8xf32> to vector<8x1xf32>
    %33 = arith.truncf %30 : vector<8x32xf32> to vector<8x32xbf16>
    %c0_21 = arith.constant 0 : index
    %c0_22 = arith.constant 0 : index
    %34 = vector.load %arg9[%c0_21, %c0_22] : memref<32x32xbf16, #tpu.memory_space<vmem>>, vector<32x32xbf16>
    %cst_23 = arith.constant dense<0.000000e+00> : vector<8x32xf32>
    %35 = tpu.matmul %33, %34, %cst_23 {dimension_numbers = #tpu.dot_dimension_numbers<[1], [0], [0], [1], [0, 0, 1, 1], [], []>} : vector<8x32xbf16>, vector<32x32xbf16>, vector<8x32xf32> -> vector<8x32xf32>
    %c0_24 = arith.constant 0 : index
    %c0_25 = arith.constant 0 : index
    %36 = vector.load %arg10[%c0_24, %c0_25] : memref<1x32xf32, #tpu.memory_space<vmem>>, vector<1x32xf32>
    %37 = vector.broadcast %36 : vector<1x32xf32> to vector<8x32xf32>
    %38 = vector.broadcast %32 : vector<8x1xf32> to vector<8x32xf32>
    %39 = arith.mulf %37, %38 : vector<8x32xf32>
    %40 = arith.addf %35, %39 : vector<8x32xf32>
    %cst_26 = arith.constant 2.500000e-01 : f32
    %41 = vector.broadcast %cst_26 : f32 to vector<8x32xf32>
    %42 = arith.mulf %40, %41 : vector<8x32xf32>
    %43 = arith.addf %0, %42 : vector<8x32xf32>
    %cst_27 = arith.constant dense<0.000000e+00> : vector<8xf32>
    %44 = vector.multi_reduction <add>, %43, %cst_27 [1] : vector<8x32xf32> to vector<8xf32>
    %45 = vector.shape_cast %44 : vector<8xf32> to vector<8x1xf32>
    %cst_28 = arith.constant 3.200000e+01 : f32
    %46 = vector.broadcast %cst_28 : f32 to vector<8x1xf32>
    %47 = arith.divf %45, %46 : vector<8x1xf32>
    %48 = vector.broadcast %47 : vector<8x1xf32> to vector<8x32xf32>
    %49 = arith.subf %43, %48 : vector<8x32xf32>
    %50 = arith.mulf %49, %49 : vector<8x32xf32>
    %cst_29 = arith.constant dense<0.000000e+00> : vector<8xf32>
    %51 = vector.multi_reduction <add>, %50, %cst_29 [1] : vector<8x32xf32> to vector<8xf32>
    %52 = vector.shape_cast %51 : vector<8xf32> to vector<8x1xf32>
    %cst_30 = arith.constant 0.0322580636 : f32
    %53 = vector.broadcast %cst_30 : f32 to vector<8x1xf32>
    %54 = arith.mulf %52, %53 : vector<8x1xf32>
    %cst_31 = arith.constant 9.99999997E-7 : f32
    %55 = vector.broadcast %cst_31 : f32 to vector<8x1xf32>
    %56 = arith.addf %54, %55 : vector<8x1xf32>
    %57 = math.sqrt %56 : vector<8x1xf32>
    %cst_32 = arith.constant 9.99999997E-7 : f32
    %58 = vector.broadcast %cst_32 : f32 to vector<8x1xf32>
    %59 = arith.addf %57, %58 : vector<8x1xf32>
    %60 = tpu.reciprocal %59 {approx = true} : vector<8x1xf32> -> vector<8x1xf32>
    %c0_33 = arith.constant 0 : index
    %c0_34 = arith.constant 0 : index
    %61 = vector.load %arg11[%c0_33, %c0_34] : memref<1x32xf32, #tpu.memory_space<vmem>>, vector<1x32xf32>
    %62 = vector.broadcast %47 : vector<8x1xf32> to vector<8x32xf32>
    %63 = arith.subf %43, %62 : vector<8x32xf32>
    %64 = vector.broadcast %61 : vector<1x32xf32> to vector<8x32xf32>
    %65 = arith.mulf %64, %63 : vector<8x32xf32>
    %66 = vector.broadcast %60 : vector<8x1xf32> to vector<8x32xf32>
    %67 = arith.mulf %65, %66 : vector<8x32xf32>
    %c0_35 = arith.constant 0 : index
    %c0_36 = arith.constant 0 : index
    %68 = vector.load %arg12[%c0_35, %c0_36] : memref<1x32xf32, #tpu.memory_space<vmem>>, vector<1x32xf32>
    %69 = vector.broadcast %68 : vector<1x32xf32> to vector<8x32xf32>
    %70 = arith.addf %67, %69 : vector<8x32xf32>
    %c0_37 = arith.constant 0 : index
    %c0_38 = arith.constant 0 : index
    %71 = vector.load %arg13[%c0_37, %c0_38] : memref<8x32xf32, #tpu.memory_space<vmem>>, vector<8x32xf32>
    tpu.vector_store %arg13[%c0_37, %c0_38], %70 {strides = array<i32>} : memref<8x32xf32, #tpu.memory_space<vmem>>, vector<8x32xf32>,
    return
  }
  func.func @transform_0(%arg0: i32) -> (i32, i32) {
    %c0_i32 = arith.constant 0 : i32
    %c0_i32_0 = arith.constant 0 : i32
    return %arg0, %c0_i32 : i32, i32
  }
  func.func @transform_1(%arg0: i32) -> (i32, i32) {
    %c0_i32 = arith.constant 0 : i32
    %c0_i32_0 = arith.constant 0 : i32
    return %arg0, %c0_i32 : i32, i32
  }
  func.func @transform_2(%arg0: i32) -> (i32, i32) {
    %c0_i32 = arith.constant 0 : i32
    %c0_i32_0 = arith.constant 0 : i32
    return %arg0, %c0_i32 : i32, i32
  }
  func.func @transform_3(%arg0: i32) -> (i32, i32) {
    %c0_i32 = arith.constant 0 : i32
    %c0_i32_0 = arith.constant 0 : i32
    %c0_i32_1 = arith.constant 0 : i32
    return %c0_i32, %c0_i32_0 : i32, i32
  }
  func.func @transform_4(%arg0: i32) -> (i32, i32) {
    %c0_i32 = arith.constant 0 : i32
    %c0_i32_0 = arith.constant 0 : i32
    %c0_i32_1 = arith.constant 0 : i32
    return %c0_i32, %c0_i32_0 : i32, i32
  }
  func.func @transform_5(%arg0: i32) -> (i32, i32) {
    %c0_i32 = arith.constant 0 : i32
    %c0_i32_0 = arith.constant 0 : i32
    %c0_i32_1 = arith.constant 0 : i32
    return %c0_i32, %c0_i32_0 : i32, i32
  }
  func.func @transform_6(%arg0: i32) -> (i32, i32) {
    %c0_i32 = arith.constant 0 : i32
    %c0_i32_0 = arith.constant 0 : i32
    %c0_i32_1 = arith.constant 0 : i32
    return %c0_i32, %c0_i32_0 : i32, i32
  }
  func.func @transform_7(%arg0: i32) -> (i32, i32) {
    %c0_i32 = arith.constant 0 : i32
    %c0_i32_0 = arith.constant 0 : i32
    %c0_i32_1 = arith.constant 0 : i32
    return %c0_i32, %c0_i32_0 : i32, i32
  }
  func.func @transform_8(%arg0: i32) -> (i32, i32) {
    %c0_i32 = arith.constant 0 : i32
    %c0_i32_0 = arith.constant 0 : i32
    %c0_i32_1 = arith.constant 0 : i32
    return %c0_i32, %c0_i32_0 : i32, i32
  }
  func.func @transform_9(%arg0: i32) -> (i32, i32) {
    %c0_i32 = arith.constant 0 : i32
    %c0_i32_0 = arith.constant 0 : i32
    %c0_i32_1 = arith.constant 0 : i32
    return %c0_i32, %c0_i32_0 : i32, i32
  }
  func.func @transform_10(%arg0: i32) -> (i32, i32) {
    %c0_i32 = arith.constant 0 : i32
    %c0_i32_0 = arith.constant 0 : i32
    %c0_i32_1 = arith.constant 0 : i32
    return %c0_i32, %c0_i32_0 : i32, i32
  }
  func.func @transform_11(%arg0: i32) -> (i32, i32) {
    %c0_i32 = arith.constant 0 : i32
    %c0_i32_0 = arith.constant 0 : i32
    %c0_i32_1 = arith.constant 0 : i32
    return %c0_i32, %c0_i32_0 : i32, i32
  }
  func.func @transform_12(%arg0: i32) -> (i32, i32) {
    %c0_i32 = arith.constant 0 : i32
    %c0_i32_0 = arith.constant 0 : i32
    return %arg0, %c0_i32 : i32, i32
  }
}

</mosaic_0001>

<llo_original>
// kernel: tpu_custom_call.1
$region0: #{tpu_custom_call.1}
  #allocation0 [shape = 'u32[]', space=smem, size = 0x4, offset = 0x4, fixed_abs, tag = 'smem constant byte address 0x4 - core index']
  #allocation1 [shape = 'u32[144,128]{1,0:T(1,128)}', space=vmem, size = 0x12000, scoped, tag = 'internal scratch']
  %s0 = inlined_call_operand.vmem [shape: f32[16,32], index: 0, kind: input, shape index: {}]
  %s1 = inlined_call_operand.vmem [shape: bf16[64,32], index: 1, kind: input, shape index: {}]
  %s2 = inlined_call_operand.vmem [shape: f32[16,4], index: 2, kind: input, shape index: {}]
  %s3 = inlined_call_operand.vmem [shape: bf16[32,32], index: 3, kind: input, shape index: {}]
  %s4 = inlined_call_operand.vmem [shape: bf16[32,32], index: 4, kind: input, shape index: {}]
  %s5 = inlined_call_operand.vmem [shape: f32[1,32], index: 5, kind: input, shape index: {}]
  %s6 = inlined_call_operand.vmem [shape: bf16[32,32], index: 6, kind: input, shape index: {}]
  %s7 = inlined_call_operand.vmem [shape: f32[1,32], index: 7, kind: input, shape index: {}]
  %s8 = inlined_call_operand.vmem [shape: bf16[32,32], index: 8, kind: input, shape index: {}]
  %s9 = inlined_call_operand.vmem [shape: f32[1,32], index: 9, kind: input, shape index: {}]
  %s10 = inlined_call_operand.vmem [shape: f32[1,32], index: 10, kind: input, shape index: {}]
  %s11 = inlined_call_operand.vmem [shape: f32[1,32], index: 11, kind: input, shape index: {}]
  %s12 = inlined_call_operand.hbm [shape: f32[16,32], index: 12, kind: output, shape index: {}]
  %s13 = sld [smem:[#allocation0]]
  $region81: #{tpu_custom_call.1} parent=0
    _
  %s15 = ssub.s32 1, %s13
  %s16 = scalar_select 0, %s15, %s13
  $region1: #{tpu_custom_call.1} parent=0
    #allocation2 [shape = 'u8[8192]{0}', space=vmem, size = 0x2000, scoped, tag = 'output window, operand 0']
    #allocation3 [shape = 's32[2]{0}', space=sflag, size = 0x8, scoped, tag = 'scoped memory for tpu_custom_call.1']
    %17 = vsyncpa [#allocation3], 0
    %s18 = scalar_lea.sflag [#allocation3], 1
    %19 = vsyncpa %s18, 0
    loop: start=0, step=1, limit=4
    $region2: #{tpu_custom_call.1} parent=1 // loop_pre_header
      _
    $region3: #{tpu_custom_call.1} parent=1 // loop_header
      %s21 = sphi 0, %s25
      %p22 = scmp.ge.s32.totalorder %s21, 4
      %s31 = sphi 0, %s33
      %s34 = sphi 0, %s31
      %s35 = sphi 0, %s34
      %s51 = sphi 0, %s35
      %s57 = sphi 0, %s59
      %s60 = sphi 0, %s57
      %s61 = sphi 0, %s60
      %s77 = sphi 0, %s61
      %s83 = sphi 0, %s85
      %s86 = sphi 0, %s83
      %s87 = sphi 0, %s86
      %s103 = sphi 0, %s87
      %s107 = sphi 0, %s107
      %s109 = sphi 0, %s107
      %s110 = sphi 0, %s109
      %s124 = sphi 0, %s110
      %s128 = sphi 0, %s128
      %s130 = sphi 0, %s128
      %s131 = sphi 0, %s130
      %s145 = sphi 0, %s131
      %s149 = sphi 0, %s149
      %s151 = sphi 0, %s149
      %s152 = sphi 0, %s151
      %s166 = sphi 0, %s152
      %s170 = sphi 0, %s170
      %s172 = sphi 0, %s170
      %s173 = sphi 0, %s172
      %s187 = sphi 0, %s173
      %s191 = sphi 0, %s191
      %s193 = sphi 0, %s191
      %s194 = sphi 0, %s193
      %s208 = sphi 0, %s194
      %s212 = sphi 0, %s212
      %s214 = sphi 0, %s212
      %s215 = sphi 0, %s214
      %s229 = sphi 0, %s215
      %s233 = sphi 0, %s233
      %s235 = sphi 0, %s233
      %s236 = sphi 0, %s235
      %s250 = sphi 0, %s236
      %s254 = sphi 0, %s254
      %s256 = sphi 0, %s254
      %s257 = sphi 0, %s256
      %s271 = sphi 0, %s257
      %s275 = sphi 0, %s275
      %s277 = sphi 0, %s275
      %s278 = sphi 0, %s277
      %s292 = sphi 0, %s278
      %s298 = sphi 0, %s300
      %s301 = sphi 0, %s298
      %s302 = sphi 0, %s301
      %s318 = sphi 0, %s302
    $region4: #{tpu_custom_call.1} parent=1 // loop_header_branch
      %24 = sbr.rel (%p22) target = $region8
    $region5: #{tpu_custom_call.1} parent=1 // loop_body
      %s26 = ssub.s32 %s21, 1
      %s27 = ssub.s32 %s21, 2
      %s28 = sadd.s32 %s21, 1
      %s29 = ssub.s32 %s21, %s28
      %p30 = scmp.eq.s32.totalorder %s29, 0
      %s32 = sadd.s32 %s31, 1
      %s33 = scalar_select %p30, %s31, %s32
      %p36 = pneg %p30
      %p37 = scmp.eq.s32.totalorder %s21, 1
      %p38 = por %p36, %p37
      %p39 = scmp.ne.s32.totalorder %s31, %s34
      %p40 = scmp.eq.s32.totalorder %s21, 0
      %p41 = por %p39, %p40
      %p42 = scmp.ne.s32.totalorder %s31, %s34
      %p43 = scmp.eq.s32.totalorder %s26, 1
      %p44 = por %p42, %p43
      %p45 = scmp.ne.s32.totalorder %s34, %s35
      %p46 = scmp.eq.s32.totalorder %s26, 0
      %p47 = por %p45, %p46
      %p48 = scmp.ne.s32.totalorder %s34, %s35
      %p49 = scmp.eq.s32.totalorder %s27, 1
      %p50 = por %p48, %p49
      %p52 = scmp.ne.s32.totalorder %s35, %s51
      %p53 = scmp.eq.s32.totalorder %s27, 0
      %p54 = por %p52, %p53
      %s55 = ssub.s32 %s21, %s28
      %p56 = scmp.eq.s32.totalorder %s55, 0
      %s58 = sadd.s32 %s57, 1
      %s59 = scalar_select %p56, %s57, %s58
      %p62 = pneg %p56
      %p63 = scmp.eq.s32.totalorder %s21, 1
      %p64 = por %p62, %p63
      %p65 = scmp.ne.s32.totalorder %s57, %s60
      %p66 = scmp.eq.s32.totalorder %s21, 0
      %p67 = por %p65, %p66
      %p68 = scmp.ne.s32.totalorder %s57, %s60
      %p69 = scmp.eq.s32.totalorder %s26, 1
      %p70 = por %p68, %p69
      %p71 = scmp.ne.s32.totalorder %s60, %s61
      %p72 = scmp.eq.s32.totalorder %s26, 0
      %p73 = por %p71, %p72
      %p74 = scmp.ne.s32.totalorder %s60, %s61
      %p75 = scmp.eq.s32.totalorder %s27, 1
      %p76 = por %p74, %p75
      %p78 = scmp.ne.s32.totalorder %s61, %s77
      %p79 = scmp.eq.s32.totalorder %s27, 0
      %p80 = por %p78, %p79
      %s81 = ssub.s32 %s21, %s28
      %p82 = scmp.eq.s32.totalorder %s81, 0
      %s84 = sadd.s32 %s83, 1
      %s85 = scalar_select %p82, %s83, %s84
      %p88 = pneg %p82
      %p89 = scmp.eq.s32.totalorder %s21, 1
      %p90 = por %p88, %p89
      %p91 = scmp.ne.s32.totalorder %s83, %s86
      %p92 = scmp.eq.s32.totalorder %s21, 0
      %p93 = por %p91, %p92
      %p94 = scmp.ne.s32.totalorder %s83, %s86
      %p95 = scmp.eq.s32.totalorder %s26, 1
      %p96 = por %p94, %p95
      %p97 = scmp.ne.s32.totalorder %s86, %s87
      %p98 = scmp.eq.s32.totalorder %s26, 0
      %p99 = por %p97, %p98
      %p100 = scmp.ne.s32.totalorder %s86, %s87
      %p101 = scmp.eq.s32.totalorder %s27, 1
      %p102 = por %p100, %p101
      %p104 = scmp.ne.s32.totalorder %s87, %s103
      %p105 = scmp.eq.s32.totalorder %s27, 0
      %p106 = por %p104, %p105
      %s108 = sadd.s32 %s107, 1
      %p111 = scmp.eq.s32.totalorder %s21, 1
      %p112 = scmp.ne.s32.totalorder %s107, %s109
      %p113 = scmp.eq.s32.totalorder %s21, 0
      %p114 = por %p112, %p113
      %p115 = scmp.ne.s32.totalorder %s107, %s109
      %p116 = scmp.eq.s32.totalorder %s26, 1
      %p117 = por %p115, %p116
      %p118 = scmp.ne.s32.totalorder %s109, %s110
      %p119 = scmp.eq.s32.totalorder %s26, 0
      %p120 = por %p118, %p119
      %p121 = scmp.ne.s32.totalorder %s109, %s110
      %p122 = scmp.eq.s32.totalorder %s27, 1
      %p123 = por %p121, %p122
      %p125 = scmp.ne.s32.totalorder %s110, %s124
      %p126 = scmp.eq.s32.totalorder %s27, 0
      %p127 = por %p125, %p126
      %s129 = sadd.s32 %s128, 1
      %p132 = scmp.eq.s32.totalorder %s21, 1
      %p133 = scmp.ne.s32.totalorder %s128, %s130
      %p134 = scmp.eq.s32.totalorder %s21, 0
      %p135 = por %p133, %p134
      %p136 = scmp.ne.s32.totalorder %s128, %s130
      %p137 = scmp.eq.s32.totalorder %s26, 1
      %p138 = por %p136, %p137
      %p139 = scmp.ne.s32.totalorder %s130, %s131
      %p140 = scmp.eq.s32.totalorder %s26, 0
      %p141 = por %p139, %p140
      %p142 = scmp.ne.s32.totalorder %s130, %s131
      %p143 = scmp.eq.s32.totalorder %s27, 1
      %p144 = por %p142, %p143
      %p146 = scmp.ne.s32.totalorder %s131, %s145
      %p147 = scmp.eq.s32.totalorder %s27, 0
      %p148 = por %p146, %p147
      %s150 = sadd.s32 %s149, 1
      %p153 = scmp.eq.s32.totalorder %s21, 1
      %p154 = scmp.ne.s32.totalorder %s149, %s151
      %p155 = scmp.eq.s32.totalorder %s21, 0
      %p156 = por %p154, %p155
      %p157 = scmp.ne.s32.totalorder %s149, %s151
      %p158 = scmp.eq.s32.totalorder %s26, 1
      %p159 = por %p157, %p158
      %p160 = scmp.ne.s32.totalorder %s151, %s152
      %p161 = scmp.eq.s32.totalorder %s26, 0
      %p162 = por %p160, %p161
      %p163 = scmp.ne.s32.totalorder %s151, %s152
      %p164 = scmp.eq.s32.totalorder %s27, 1
      %p165 = por %p163, %p164
      %p167 = scmp.ne.s32.totalorder %s152, %s166
      %p168 = scmp.eq.s32.totalorder %s27, 0
      %p169 = por %p167, %p168
      %s171 = sadd.s32 %s170, 1
      %p174 = scmp.eq.s32.totalorder %s21, 1
      %p175 = scmp.ne.s32.totalorder %s170, %s172
      %p176 = scmp.eq.s32.totalorder %s21, 0
      %p177 = por %p175, %p176
      %p178 = scmp.ne.s32.totalorder %s170, %s172
      %p179 = scmp.eq.s32.totalorder %s26, 1
      %p180 = por %p178, %p179
      %p181 = scmp.ne.s32.totalorder %s172, %s173
      %p182 = scmp.eq.s32.totalorder %s26, 0
      %p183 = por %p181, %p182
      %p184 = scmp.ne.s32.totalorder %s172, %s173
      %p185 = scmp.eq.s32.totalorder %s27, 1
      %p186 = por %p184, %p185
      %p188 = scmp.ne.s32.totalorder %s173, %s187
      %p189 = scmp.eq.s32.totalorder %s27, 0
      %p190 = por %p188, %p189
      %s192 = sadd.s32 %s191, 1
      %p195 = scmp.eq.s32.totalorder %s21, 1
      %p196 = scmp.ne.s32.totalorder %s191, %s193
      %p197 = scmp.eq.s32.totalorder %s21, 0
      %p198 = por %p196, %p197
      %p199 = scmp.ne.s32.totalorder %s191, %s193
      %p200 = scmp.eq.s32.totalorder %s26, 1
      %p201 = por %p199, %p200
      %p202 = scmp.ne.s32.totalorder %s193, %s194
      %p203 = scmp.eq.s32.totalorder %s26, 0
      %p204 = por %p202, %p203
      %p205 = scmp.ne.s32.totalorder %s193, %s194
      %p206 = scmp.eq.s32.totalorder %s27, 1
      %p207 = por %p205, %p206
      %p209 = scmp.ne.s32.totalorder %s194, %s208
      %p210 = scmp.eq.s32.totalorder %s27, 0
      %p211 = por %p209, %p210
      %s213 = sadd.s32 %s212, 1
      %p216 = scmp.eq.s32.totalorder %s21, 1
      %p217 = scmp.ne.s32.totalorder %s212, %s214
      %p218 = scmp.eq.s32.totalorder %s21, 0
      %p219 = por %p217, %p218
      %p220 = scmp.ne.s32.totalorder %s212, %s214
      %p221 = scmp.eq.s32.totalorder %s26, 1
      %p222 = por %p220, %p221
      %p223 = scmp.ne.s32.totalorder %s214, %s215
      %p224 = scmp.eq.s32.totalorder %s26, 0
      %p225 = por %p223, %p224
      %p226 = scmp.ne.s32.totalorder %s214, %s215
      %p227 = scmp.eq.s32.totalorder %s27, 1
      %p228 = por %p226, %p227
      %p230 = scmp.ne.s32.totalorder %s215, %s229
      %p231 = scmp.eq.s32.totalorder %s27, 0
      %p232 = por %p230, %p231
      %s234 = sadd.s32 %s233, 1
      %p237 = scmp.eq.s32.totalorder %s21, 1
      %p238 = scmp.ne.s32.totalorder %s233, %s235
      %p239 = scmp.eq.s32.totalorder %s21, 0
      %p240 = por %p238, %p239
      %p241 = scmp.ne.s32.totalorder %s233, %s235
      %p242 = scmp.eq.s32.totalorder %s26, 1
      %p243 = por %p241, %p242
      %p244 = scmp.ne.s32.totalorder %s235, %s236
      %p245 = scmp.eq.s32.totalorder %s26, 0
      %p246 = por %p244, %p245
      %p247 = scmp.ne.s32.totalorder %s235, %s236
      %p248 = scmp.eq.s32.totalorder %s27, 1
      %p249 = por %p247, %p248
      %p251 = scmp.ne.s32.totalorder %s236, %s250
      %p252 = scmp.eq.s32.totalorder %s27, 0
      %p253 = por %p251, %p252
      %s255 = sadd.s32 %s254, 1
      %p258 = scmp.eq.s32.totalorder %s21, 1
      %p259 = scmp.ne.s32.totalorder %s254, %s256
      %p260 = scmp.eq.s32.totalorder %s21, 0
      %p261 = por %p259, %p260
      %p262 = scmp.ne.s32.totalorder %s254, %s256
      %p263 = scmp.eq.s32.totalorder %s26, 1
      %p264 = por %p262, %p263
      %p265 = scmp.ne.s32.totalorder %s256, %s257
      %p266 = scmp.eq.s32.totalorder %s26, 0
      %p267 = por %p265, %p266
      %p268 = scmp.ne.s32.totalorder %s256, %s257
      %p269 = scmp.eq.s32.totalorder %s27, 1
      %p270 = por %p268, %p269
      %p272 = scmp.ne.s32.totalorder %s257, %s271
      %p273 = scmp.eq.s32.totalorder %s27, 0
      %p274 = por %p272, %p273
      %s276 = sadd.s32 %s275, 1
      %p279 = scmp.eq.s32.totalorder %s21, 1
      %p280 = scmp.ne.s32.totalorder %s275, %s277
      %p281 = scmp.eq.s32.totalorder %s21, 0
      %p282 = por %p280, %p281
      %p283 = scmp.ne.s32.totalorder %s275, %s277
      %p284 = scmp.eq.s32.totalorder %s26, 1
      %p285 = por %p283, %p284
      %p286 = scmp.ne.s32.totalorder %s277, %s278
      %p287 = scmp.eq.s32.totalorder %s26, 0
      %p288 = por %p286, %p287
      %p289 = scmp.ne.s32.totalorder %s277, %s278
      %p290 = scmp.eq.s32.totalorder %s27, 1
      %p291 = por %p289, %p290
      %p293 = scmp.ne.s32.totalorder %s278, %s292
      %p294 = scmp.eq.s32.totalorder %s27, 0
      %p295 = por %p293, %p294
      %s296 = ssub.s32 %s21, %s28
      %p297 = scmp.eq.s32.totalorder %s296, 0
      %s299 = sadd.s32 %s298, 1
      %s300 = scalar_select %p297, %s298, %s299
      %p303 = pneg %p297
      %p304 = scmp.eq.s32.totalorder %s21, 1
      %p305 = por %p303, %p304
      %p306 = scmp.ne.s32.totalorder %s298, %s301
      %p307 = scmp.eq.s32.totalorder %s21, 0
      %p308 = por %p306, %p307
      %p309 = scmp.ne.s32.totalorder %s298, %s301
      %p310 = scmp.eq.s32.totalorder %s26, 1
      %p311 = por %p309, %p310
      %p312 = scmp.ne.s32.totalorder %s301, %s302
      %p313 = scmp.eq.s32.totalorder %s26, 0
      %p314 = por %p312, %p313
      %p315 = scmp.ne.s32.totalorder %s301, %s302
      %p316 = scmp.eq.s32.totalorder %s27, 1
      %p317 = por %p315, %p316
      %p319 = scmp.ne.s32.totalorder %s302, %s318
      %p320 = scmp.eq.s32.totalorder %s27, 0
      %p321 = por %p319, %p320
      %p322 = scmp.le.s32.totalorder 1, %s21
      %p323 = scmp.lt.s32.totalorder %s21, 3
      %p324 = pnand %p322, %p323
      %p325 = pneg %p324
      // Predicated region
      $region9: #{tpu_custom_call.1} parent=5 // pred_check
        _
      $region10: #{tpu_custom_call.1} parent=5 // pred_check_branch
        %327 = sbr.rel (%p324) target = $region12
      $region11: #{tpu_custom_call.1} parent=5 // pred_region
        %s328 = ssub.s32 %s21, 1
        // Predicated region
        $region13: #{tpu_custom_call.1} parent=11 // pred_check
          %p329 = pneg %p120
        $region14: #{tpu_custom_call.1} parent=11 // pred_check_branch
          %331 = sbr.rel (%p329) target = $region16
        $region15: #{tpu_custom_call.1} parent=11 // pred_region
          _
        $region16: #{tpu_custom_call.1} parent=11 // pred_fallthru
          _
        // Predicated region
        $region17: #{tpu_custom_call.1} parent=11 // pred_check
          %p332 = pneg %p141
        $region18: #{tpu_custom_call.1} parent=11 // pred_check_branch
          %334 = sbr.rel (%p332) target = $region20
        $region19: #{tpu_custom_call.1} parent=11 // pred_region
          _
        $region20: #{tpu_custom_call.1} parent=11 // pred_fallthru
          _
        // Predicated region
        $region21: #{tpu_custom_call.1} parent=11 // pred_check
          %p335 = pneg %p162
        $region22: #{tpu_custom_call.1} parent=11 // pred_check_branch
          %337 = sbr.rel (%p335) target = $region24
        $region23: #{tpu_custom_call.1} parent=11 // pred_region
          _
        $region24: #{tpu_custom_call.1} parent=11 // pred_fallthru
          _
        // Predicated region
        $region25: #{tpu_custom_call.1} parent=11 // pred_check
          %p338 = pneg %p183
        $region26: #{tpu_custom_call.1} parent=11 // pred_check_branch
          %340 = sbr.rel (%p338) target = $region28
        $region27: #{tpu_custom_call.1} parent=11 // pred_region
          _
        $region28: #{tpu_custom_call.1} parent=11 // pred_fallthru
          _
        // Predicated region
        $region29: #{tpu_custom_call.1} parent=11 // pred_check
          %p341 = pneg %p204
        $region30: #{tpu_custom_call.1} parent=11 // pred_check_branch
          %343 = sbr.rel (%p341) target = $region32
        $region31: #{tpu_custom_call.1} parent=11 // pred_region
          _
        $region32: #{tpu_custom_call.1} parent=11 // pred_fallthru
          _
        // Predicated region
        $region33: #{tpu_custom_call.1} parent=11 // pred_check
          %p344 = pneg %p225
        $region34: #{tpu_custom_call.1} parent=11 // pred_check_branch
          %346 = sbr.rel (%p344) target = $region36
        $region35: #{tpu_custom_call.1} parent=11 // pred_region
          _
        $region36: #{tpu_custom_call.1} parent=11 // pred_fallthru
          _
        // Predicated region
        $region37: #{tpu_custom_call.1} parent=11 // pred_check
          %p347 = pneg %p246
        $region38: #{tpu_custom_call.1} parent=11 // pred_check_branch
          %349 = sbr.rel (%p347) target = $region40
        $region39: #{tpu_custom_call.1} parent=11 // pred_region
          _
        $region40: #{tpu_custom_call.1} parent=11 // pred_fallthru
          _
        // Predicated region
        $region41: #{tpu_custom_call.1} parent=11 // pred_check
          %p350 = pneg %p267
        $region42: #{tpu_custom_call.1} parent=11 // pred_check_branch
          %352 = sbr.rel (%p350) target = $region44
        $region43: #{tpu_custom_call.1} parent=11 // pred_region
          _
        $region44: #{tpu_custom_call.1} parent=11 // pred_fallthru
          _
        // Predicated region
        $region45: #{tpu_custom_call.1} parent=11 // pred_check
          %p353 = pneg %p288
        $region46: #{tpu_custom_call.1} parent=11 // pred_check_branch
          %355 = sbr.rel (%p353) target = $region48
        $region47: #{tpu_custom_call.1} parent=11 // pred_region
          _
        $region48: #{tpu_custom_call.1} parent=11 // pred_fallthru
          _
      $region12: #{tpu_custom_call.1} parent=5 // pred_fallthru
        _
      %p356 = scmp.lt.s32.totalorder %s21, 2
      // Predicated region
      $region49: #{tpu_custom_call.1} parent=5 // pred_check
        %p357 = pneg %p356
      $region50: #{tpu_custom_call.1} parent=5 // pred_check_branch
        %359 = sbr.rel (%p357) target = $region52
      $region51: #{tpu_custom_call.1} parent=5 // pred_region
        // Predicated region
        $region53: #{tpu_custom_call.1} parent=51 // pred_check
          %p360 = pneg %p41
        $region54: #{tpu_custom_call.1} parent=51 // pred_check_branch
          %362 = sbr.rel (%p360) target = $region56
        $region55: #{tpu_custom_call.1} parent=51 // pred_region
          %p363 = scmp.lt.s32.totalorder %s21, 1
          %s364 = scalar_select %p363, %s21, 1
          %s365 = smul.addr %s364, 8
          %s366 = scalar_lea.vmem %s0, %s365
        $region56: #{tpu_custom_call.1} parent=51 // pred_fallthru
          _
        // Predicated region
        $region57: #{tpu_custom_call.1} parent=51 // pred_check
          %p367 = pneg %p67
        $region58: #{tpu_custom_call.1} parent=51 // pred_check_branch
          %369 = sbr.rel (%p367) target = $region60
        $region59: #{tpu_custom_call.1} parent=51 // pred_region
          %s370 = smul.u32 4, %s21
          %p371 = scmp.lt.s32.totalorder %s370, 7
          %s372 = scalar_select %p371, %s370, 7
          %s373 = smul.addr %s372, 4
          %s374 = scalar_lea.vmem %s1, %s373
          %s375 = smul.u32 4, %s21
        $region60: #{tpu_custom_call.1} parent=51 // pred_fallthru
          _
        // Predicated region
        $region61: #{tpu_custom_call.1} parent=51 // pred_check
          %p376 = pneg %p93
        $region62: #{tpu_custom_call.1} parent=51 // pred_check_branch
          %378 = sbr.rel (%p376) target = $region64
        $region63: #{tpu_custom_call.1} parent=51 // pred_region
          %p379 = scmp.lt.s32.totalorder %s21, 1
          %s380 = scalar_select %p379, %s21, 1
          %s381 = smul.addr %s380, 8
          %s382 = scalar_lea.vmem %s2, %s381
        $region64: #{tpu_custom_call.1} parent=51 // pred_fallthru
          _
      $region52: #{tpu_custom_call.1} parent=5 // pred_fallthru
        _
      %p383 = scmp.le.s32.totalorder 1, %s21
      %p384 = scmp.lt.s32.totalorder %s21, 3
      %p385 = pnand %p383, %p384
      %p386 = pneg %p385
      // Predicated region
      $region65: #{tpu_custom_call.1} parent=5 // pred_check
        _
      $region66: #{tpu_custom_call.1} parent=5 // pred_check_branch
        %388 = sbr.rel (%p385) target = $region68
      $region67: #{tpu_custom_call.1} parent=5 // pred_region
        %s389 = ssub.s32 %s21, 1
        %p390 = scmp.lt.s32.totalorder %s26, 1
        %s391 = scalar_select %p390, %s26, 1
        %s392 = smul.addr %s391, 8
        %s393 = scalar_lea.vmem %s0, %s392
        %p394 = pneg %p47
        %p395 = pneg %p44
        %s396 = smul.u32 4, %s26
        %p397 = scmp.lt.s32.totalorder %s396, 7
        %s398 = scalar_select %p397, %s396, 7
        %s399 = smul.addr %s398, 4
        %s400 = scalar_lea.vmem %s1, %s399
        %p401 = pneg %p73
        %p402 = pneg %p70
        %p403 = scmp.lt.s32.totalorder %s26, 1
        %s404 = scalar_select %p403, %s26, 1
        %s405 = smul.addr %s404, 8
        %s406 = scalar_lea.vmem %s2, %s405
        %p407 = pneg %p99
        %p408 = pneg %p96
        %p409 = pneg %p120
        %p410 = pneg %p117
        %p411 = pneg %p141
        %p412 = pneg %p138
        %p413 = pneg %p162
        %p414 = pneg %p159
        %p415 = pneg %p183
        %p416 = pneg %p180
        %p417 = pneg %p204
        %p418 = pneg %p201
        %p419 = pneg %p225
        %p420 = pneg %p222
        %p421 = pneg %p246
        %p422 = pneg %p243
        %p423 = pneg %p267
        %p424 = pneg %p264
        %p425 = pneg %p288
        %p426 = pneg %p285
        %p427 = pneg %p314
        %p428 = pneg %p311
        %s429 = sand.u32 %s301, 1
        %s430 = scalar_lea.sflag [#allocation3], %s429
        %s431 = sand.u32 %s301, 1
        %s432 = smul.addr %s431, 8
        %s433 = scalar_lea.vmem [#allocation2], %s432
        %p434 = scmp.lt.s32.totalorder %s26, 1
        %s435 = scalar_select %p434, %s26, 1
        %s436 = smul.addr %s435, 8
        %s437 = scalar_lea.vmem %s0, %s436
        %s438 = smul.u32 4, %s26
        %p439 = scmp.lt.s32.totalorder %s438, 7
        %s440 = scalar_select %p439, %s438, 7
        %s441 = smul.addr %s440, 4
        %s442 = scalar_lea.vmem %s1, %s441
        %s443 = smul.u32 4, %s26
        %p444 = scmp.lt.s32.totalorder %s26, 1
        %s445 = scalar_select %p444, %s26, 1
        %s446 = smul.addr %s445, 8
        %s447 = scalar_lea.vmem %s2, %s446
        %v449 = vld [vmem:[%s437] sm:$0xff]
        %v450 = vpack.c.bf16 %v449, %v449
        %v451 = vld [vmem:[%s3] sm:$0xf]
        %v452 = vld [vmem:[%s3 + $0x4] sm:$0xf]
        %v453 = vld [vmem:[%s3 + $0x8] sm:$0xf]
        %v454 = vld [vmem:[%s3 + $0xc] sm:$0xf]
        %v455 = vld [vmem:[%s5] sm:$0x1]
        %v457 = vlaneseq
        %v458 = vshrl.u32 %v457, 7
        %v459 = vsub.s32 0, %v458
        %v460 = vrot.slane %v455, %v459
        %v466 = vunpack.c.l.b16 %v451
        %v467 = vunpack.c.l.b16 %v452
        %v468 = vunpack.c.l.b16 %v453
        %v469 = vunpack.c.l.b16 %v454
        %v470 = vpack.c.b16 %v467, %v466
        %v471 = vpack.c.b16 %v469, %v468
        %vm474 = vcmask 261120
        %v476 = vsel %vm474, %v450, 0
        %478 = vmatprep.subr.bf16.mxu0 0
        %479 = vmatpush1.bf16.msra.mxu0 %v470
        %480 = vmatprep.subr.bf16.mxu0 0
        %481 = vmatpush1.bf16.msra.mxu0 %v471
        %482 = vmatprep.subr.bf16.mxu0 0
        %483 = vmatpush1.bf16.msra.mxu0 0
        %484 = vmatprep.subr.bf16.mxu0 0
        %485 = vmatpush1.bf16.msra.mxu0 0
        %486 = vmatprep.subr.bf16.mxu0 0
        %487 = vmatpush1.bf16.msra.mxu0 0
        %488 = vmatprep.subr.bf16.mxu0 0
        %489 = vmatpush1.bf16.msra.mxu0 0
        %490 = vmatprep.subr.bf16.mxu0 0
        %491 = vmatpush1.bf16.msra.mxu0 0
        %492 = vmatprep.subr.bf16.mxu0 0
        %493 = vmatpush1.bf16.msra.mxu0 0
        %494 = vmatprep.subr.bf16.mxu0 0
        %495 = vmatpush1.bf16.msra.mxu0 0
        %496 = vmatprep.subr.bf16.mxu0 0
        %497 = vmatpush1.bf16.msra.mxu0 0
        %498 = vmatprep.subr.bf16.mxu0 0
        %499 = vmatpush1.bf16.msra.mxu0 0
        %500 = vmatprep.subr.bf16.mxu0 0
        %501 = vmatpush1.bf16.msra.mxu0 0
        %502 = vmatprep.subr.bf16.mxu0 0
        %503 = vmatpush1.bf16.msra.mxu0 0
        %504 = vmatprep.subr.bf16.mxu0 0
        %505 = vmatpush1.bf16.msra.mxu0 0
        %506 = vmatprep.subr.bf16.mxu0 0
        %507 = vmatpush1.bf16.msra.mxu0 0
        %508 = vmatprep.subr.bf16.mxu0 0
        %509 = vmatpush1.bf16.msra.mxu0 0
        %510 = vmatprep.mubr.bf16.mxu0 0
        %511 = vmatmul.mubr.bf16.gmra.mrb[0].mxu0 %v476
        %v512 = vpop.f32.mrb[0].mxu0
        %v513 = vadd.f32 %v460, %v512
        %v514 = vpop.f32.mrb[0].mxu0
        %v515 = vpop.f32.mrb[0].mxu0
        %v516 = vpop.f32.mrb[0].mxu0
        %517 = vdwg.mxu0
        %v518 = vld [vmem:[%s442] sm:$0xf]
        %v519 = vld [vmem:[%s442 + $0x4] sm:$0xf]
        %v520 = vld [vmem:[%s442 + $0x8] sm:$0xf]
        %v521 = vld [vmem:[%s442 + $0xc] sm:$0xf]
        %v522 = vld [vmem:[%s4] sm:$0xf]
        %v523 = vld [vmem:[%s4 + $0x4] sm:$0xf]
        %v524 = vld [vmem:[%s4 + $0x8] sm:$0xf]
        %v525 = vld [vmem:[%s4 + $0xc] sm:$0xf]
        %v530 = vunpack.c.l.b16 %v518
        %v531 = vunpack.c.l.b16 %v519
        %v532 = vunpack.c.l.b16 %v520
        %v533 = vunpack.c.l.b16 %v521
        %v534 = vpack.c.b16 %v531, %v530
        %v535 = vpack.c.b16 %v533, %v532
        %v540 = vunpack.c.l.b16 %v522
        %v541 = vunpack.c.l.b16 %v523
        %v542 = vunpack.c.l.b16 %v524
        %v543 = vunpack.c.l.b16 %v525
        %v544 = vpack.c.b16 %v541, %v540
        %v545 = vpack.c.b16 %v543, %v542
        %v549 = vsel %vm474, %v534, 0
        %v552 = vsel %vm474, %v535, 0
        %554 = vmatprep.subr.bf16.mxu0 0
        %555 = vmatpush1.bf16.msra.mxu0 %v544
        %556 = vmatprep.subr.bf16.mxu0 0
        %557 = vmatpush1.bf16.msra.mxu0 %v545
        %558 = vmatprep.subr.bf16.mxu0 0
        %559 = vmatpush1.bf16.msra.mxu0 0
        %560 = vmatprep.subr.bf16.mxu0 0
        %561 = vmatpush1.bf16.msra.mxu0 0
        %562 = vmatprep.subr.bf16.mxu0 0
        %563 = vmatpush1.bf16.msra.mxu0 0
        %564 = vmatprep.subr.bf16.mxu0 0
        %565 = vmatpush1.bf16.msra.mxu0 0
        %566 = vmatprep.subr.bf16.mxu0 0
        %567 = vmatpush1.bf16.msra.mxu0 0
        %568 = vmatprep.subr.bf16.mxu0 0
        %569 = vmatpush1.bf16.msra.mxu0 0
        %570 = vmatprep.subr.bf16.mxu0 0
        %571 = vmatpush1.bf16.msra.mxu0 0
        %572 = vmatprep.subr.bf16.mxu0 0
        %573 = vmatpush1.bf16.msra.mxu0 0
        %574 = vmatprep.subr.bf16.mxu0 0
        %575 = vmatpush1.bf16.msra.mxu0 0
        %576 = vmatprep.subr.bf16.mxu0 0
        %577 = vmatpush1.bf16.msra.mxu0 0
        %578 = vmatprep.subr.bf16.mxu0 0
        %579 = vmatpush1.bf16.msra.mxu0 0
        %580 = vmatprep.subr.bf16.mxu0 0
        %581 = vmatpush1.bf16.msra.mxu0 0
        %582 = vmatprep.subr.bf16.mxu0 0
        %583 = vmatpush1.bf16.msra.mxu0 0
        %584 = vmatprep.subr.bf16.mxu0 0
        %585 = vmatpush1.bf16.msra.mxu0 0
        %586 = vmatprep.mubr.bf16.mxu0 0
        %587 = vmatmul.mubr.bf16.gmra.mrb[0].mxu0 %v549
        %v588 = vpop.f32.mrb[0].mxu0
        %v589 = vadd.f32 0.0, %v588
        %v590 = vpop.f32.mrb[0].mxu0
        %v591 = vpop.f32.mrb[0].mxu0
        %v592 = vadd.f32 0.0, %v591
        %v593 = vpop.f32.mrb[0].mxu0
        %594 = vmatprep.mubr.bf16.mxu0 0
        %595 = vmatmul.mubr.bf16.gmra.mrb[0].mxu0 %v552
        %v596 = vpop.f32.mrb[0].mxu0
        %v597 = vadd.f32 0.0, %v596
        %v598 = vpop.f32.mrb[0].mxu0
        %v599 = vpop.f32.mrb[0].mxu0
        %v600 = vadd.f32 0.0, %v599
        %v601 = vpop.f32.mrb[0].mxu0
        %602 = vdwg.mxu0
        %v607 = vcombine.high %v589, %v589
        %v608 = vcombine.high %v592, %v592
        %v609 = vcombine.high %v597, %v597
        %v610 = vcombine.high %v600, %v600
        %v616 = vcombine.high %v513, %v513
        %v618 = vunpack.c.l.s4 1966171168
        %v619 = vunpack.c.0.s8 %v618
        %v620 = vlaneseq
        %v621 = vshrl.u32 %v620, 7
        %v622 = vsub.s32 %v619, %v621
        %v623 = vrot.slane %v513, %v622
        %v625 = vunpack.c.l.s4 1966171168
        %v626 = vunpack.c.0.s8 %v625
        %v627 = vlaneseq
        %v628 = vshrl.u32 %v627, 7
        %v629 = vsub.s32 %v626, %v628
        %v630 = vrot.slane %v616, %v629
        %v631 = vcombine.high %v623, %v623
        %v632 = vcombine.high %v630, %v630
        %v634 = vunpack.c.l.s4 1966171168
        %v635 = vunpack.c.0.s8 %v634
        %v636 = vlaneseq
        %v637 = vshrl.u32 %v636, 7
        %v638 = vsub.s32 %v635, %v637
        %v639 = vrot.slane %v623, %v638
        %v641 = vunpack.c.l.s4 1966171168
        %v642 = vunpack.c.0.s8 %v641
        %v643 = vlaneseq
        %v644 = vshrl.u32 %v643, 7
        %v645 = vsub.s32 %v642, %v644
        %v646 = vrot.slane %v630, %v645
        %v648 = vunpack.c.l.s4 1966171168
        %v649 = vunpack.c.0.s8 %v648
        %v650 = vlaneseq
        %v651 = vshrl.u32 %v650, 7
        %v652 = vsub.s32 %v649, %v651
        %v653 = vrot.slane %v631, %v652
        %v655 = vunpack.c.l.s4 1966171168
        %v656 = vunpack.c.0.s8 %v655
        %v657 = vlaneseq
        %v658 = vshrl.u32 %v657, 7
        %v659 = vsub.s32 %v656, %v658
        %v660 = vrot.slane %v632, %v659
        %v661 = vcombine.high %v639, %v639
        %v662 = vcombine.high %v646, %v646
        %v663 = vcombine.high %v653, %v653
        %v664 = vcombine.high %v660, %v660
        %v665 = vlaneseq
        %v666 = vshrl.u32 %v665, 7
        %v667 = vsub.s32 0, %v666
        %v668 = vrot.slane %v639, %v667
        %v669 = vlaneseq
        %v670 = vshrl.u32 %v669, 7
        %v671 = vsub.s32 0, %v670
        %v672 = vrot.slane %v653, %v671
        %v673 = vlaneseq
        %v674 = vshrl.u32 %v673, 7
        %v675 = vsub.s32 0, %v674
        %v676 = vrot.slane %v661, %v675
        %v677 = vlaneseq
        %v678 = vshrl.u32 %v677, 7
        %v679 = vsub.s32 0, %v678
        %v680 = vrot.slane %v663, %v679
        %v681 = vlaneseq
        %v682 = vshrl.u32 %v681, 7
        %v683 = vsub.s32 0, %v682
        %v684 = vrot.slane %v646, %v683
        %v685 = vlaneseq
        %v686 = vshrl.u32 %v685, 7
        %v687 = vsub.s32 0, %v686
        %v688 = vrot.slane %v660, %v687
        %v689 = vlaneseq
        %v690 = vshrl.u32 %v689, 7
        %v691 = vsub.s32 0, %v690
        %v692 = vrot.slane %v662, %v691
        %v693 = vlaneseq
        %v694 = vshrl.u32 %v693, 7
        %v695 = vsub.s32 0, %v694
        %v696 = vrot.slane %v664, %v695
        %v705 = vadd.f32 %v589, %v668
        %v706 = vadd.f32 %v607, %v672
        %v707 = vadd.f32 %v592, %v676
        %v708 = vadd.f32 %v608, %v680
        %v709 = vadd.f32 %v597, %v684
        %v710 = vadd.f32 %v609, %v688
        %v711 = vadd.f32 %v600, %v692
        %v712 = vadd.f32 %v610, %v696
        %v713 = vmax.f32 %v705, 0.0
        %v714 = vmax.f32 %v706, 0.0
        %v715 = vmax.f32 %v707, 0.0
        %v716 = vmax.f32 %v708, 0.0
        %v717 = vmax.f32 %v709, 0.0
        %v718 = vmax.f32 %v710, 0.0
        %v719 = vmax.f32 %v711, 0.0
        %v720 = vmax.f32 %v712, 0.0
        %v721 = vpack.c.bf16 %v713, %v713
        %v722 = vpack.c.bf16 %v714, %v714
        %v723 = vpack.c.bf16 %v715, %v715
        %v724 = vpack.c.bf16 %v716, %v716
        %v725 = vpack.c.bf16 %v717, %v717
        %v726 = vpack.c.bf16 %v718, %v718
        %v727 = vpack.c.bf16 %v719, %v719
        %v728 = vpack.c.bf16 %v720, %v720
        %v729 = vld [vmem:[%s6] sm:$0xf]
        %v730 = vld [vmem:[%s6 + $0x4] sm:$0xf]
        %v731 = vld [vmem:[%s6 + $0x8] sm:$0xf]
        %v732 = vld [vmem:[%s6 + $0xc] sm:$0xf]
        %v733 = vld [vmem:[%s7] sm:$0x1]
        %v735 = vlaneseq
        %v736 = vshrl.u32 %v735, 7
        %v737 = vsub.s32 0, %v736
        %v738 = vrot.slane %v733, %v737
        %v748 = vcombine.low %v721, %v722
        %v749 = vcombine.low %v723, %v724
        %v751 = vunpack.c.l.s4 1983009808
        %v752 = vunpack.c.0.s8 %v751
        %v753 = vlaneseq
        %v754 = vshrl.u32 %v753, 7
        %v755 = vsub.s32 %v752, %v754
        %v756 = vrot.slane %v748, %v755
        %v758 = vunpack.c.l.s4 1983009808
        %v759 = vunpack.c.0.s8 %v758
        %v760 = vlaneseq
        %v761 = vshrl.u32 %v760, 7
        %v762 = vsub.s32 %v759, %v761
        %v763 = vrot.slane %v749, %v762
        %v764 = vcombine.low %v756, %v763
        %v765 = vcombine.low %v725, %v726
        %v766 = vcombine.low %v727, %v728
        %v768 = vunpack.c.l.s4 1983009808
        %v769 = vunpack.c.0.s8 %v768
        %v770 = vlaneseq
        %v771 = vshrl.u32 %v770, 7
        %v772 = vsub.s32 %v769, %v771
        %v773 = vrot.slane %v765, %v772
        %v775 = vunpack.c.l.s4 1983009808
        %v776 = vunpack.c.0.s8 %v775
        %v777 = vlaneseq
        %v778 = vshrl.u32 %v777, 7
        %v779 = vsub.s32 %v776, %v778
        %v780 = vrot.slane %v766, %v779
        %v781 = vcombine.low %v773, %v780
        %v786 = vunpack.c.l.b16 %v729
        %v787 = vunpack.c.l.b16 %v730
        %v788 = vunpack.c.l.b16 %v731
        %v789 = vunpack.c.l.b16 %v732
        %v790 = vpack.c.b16 %v787, %v786
        %v791 = vpack.c.b16 %v789, %v788
        %v795 = vsel %vm474, %v764, 0
        %v798 = vsel %vm474, %v781, 0
        %800 = vmatprep.subr.bf16.mxu0 0
        %801 = vmatpush1.bf16.msra.mxu0 %v790
        %802 = vmatprep.subr.bf16.mxu0 0
        %803 = vmatpush1.bf16.msra.mxu0 %v791
        %804 = vmatprep.subr.bf16.mxu0 0
        %805 = vmatpush1.bf16.msra.mxu0 0
        %806 = vmatprep.subr.bf16.mxu0 0
        %807 = vmatpush1.bf16.msra.mxu0 0
        %808 = vmatprep.subr.bf16.mxu0 0
        %809 = vmatpush1.bf16.msra.mxu0 0
        %810 = vmatprep.subr.bf16.mxu0 0
        %811 = vmatpush1.bf16.msra.mxu0 0
        %812 = vmatprep.subr.bf16.mxu0 0
        %813 = vmatpush1.bf16.msra.mxu0 0
        %814 = vmatprep.subr.bf16.mxu0 0
        %815 = vmatpush1.bf16.msra.mxu0 0
        %816 = vmatprep.subr.bf16.mxu0 0
        %817 = vmatpush1.bf16.msra.mxu0 0
        %818 = vmatprep.subr.bf16.mxu0 0
        %819 = vmatpush1.bf16.msra.mxu0 0
        %820 = vmatprep.subr.bf16.mxu0 0
        %821 = vmatpush1.bf16.msra.mxu0 0
        %822 = vmatprep.subr.bf16.mxu0 0
        %823 = vmatpush1.bf16.msra.mxu0 0
        %824 = vmatprep.subr.bf16.mxu0 0
        %825 = vmatpush1.bf16.msra.mxu0 0
        %826 = vmatprep.subr.bf16.mxu0 0
        %827 = vmatpush1.bf16.msra.mxu0 0
        %828 = vmatprep.subr.bf16.mxu0 0
        %829 = vmatpush1.bf16.msra.mxu0 0
        %830 = vmatprep.subr.bf16.mxu0 0
        %831 = vmatpush1.bf16.msra.mxu0 0
        %832 = vmatprep.mubr.bf16.mxu0 0
        %833 = vmatmul.mubr.bf16.gmra.mrb[0].mxu0 %v795
        %v834 = vpop.f32.mrb[0].mxu0
        %v835 = vadd.f32 %v738, %v834
        %v836 = vpop.f32.mrb[0].mxu0
        %v837 = vpop.f32.mrb[0].mxu0
        %v838 = vadd.f32 %v738, %v837
        %v839 = vpop.f32.mrb[0].mxu0
        %840 = vmatprep.mubr.bf16.mxu0 0
        %841 = vmatmul.mubr.bf16.gmra.mrb[0].mxu0 %v798
        %v842 = vpop.f32.mrb[0].mxu0
        %v843 = vadd.f32 %v738, %v842
        %v844 = vpop.f32.mrb[0].mxu0
        %v845 = vpop.f32.mrb[0].mxu0
        %v846 = vadd.f32 %v738, %v845
        %v847 = vpop.f32.mrb[0].mxu0
        %848 = vdwg.mxu0
        %v849 = vmax.f32 %v835, 0.0
        %v850 = vmax.f32 %v838, 0.0
        %v851 = vmax.f32 %v843, 0.0
        %v852 = vmax.f32 %v846, 0.0
        %v853 = vld [vmem:[%s447] sm:$0xff]
        %v858 = vcombine.high %v849, %v849
        %v859 = vcombine.high %v850, %v850
        %v860 = vcombine.high %v851, %v851
        %v861 = vcombine.high %v852, %v852
        %v866 = vlaneseq
        %v867 = vshrl.u32 %v866, 7
        %v868 = vsub.s32 0, %v867
        %v869 = vrot.slane %v853, %v868
        %871 = vbcast.lane.b32.xlu0 %v869, 256
        %v872 = vpop.permute.xlu0 %871
        %v873 = vlaneseq
        %v874 = vshrl.u32 %v873, 7
        %v875 = vsub.s32 1, %v874
        %v876 = vrot.slane %v853, %v875
        %878 = vbcast.lane.b32.xlu0 %v876, 256
        %v879 = vpop.permute.xlu0 %878
        %v880 = vlaneseq
        %v881 = vshrl.u32 %v880, 7
        %v882 = vsub.s32 2, %v881
        %v883 = vrot.slane %v853, %v882
        %885 = vbcast.lane.b32.xlu0 %v883, 256
        %v886 = vpop.permute.xlu0 %885
        %v887 = vlaneseq
        %v888 = vshrl.u32 %v887, 7
        %v889 = vsub.s32 3, %v888
        %v890 = vrot.slane %v853, %v889
        %892 = vbcast.lane.b32.xlu0 %v890, 256
        %v893 = vpop.permute.xlu0 %892
        %v894 = vlaneseq
        %v895 = vshrl.u32 %v894, 7
        %v896 = vsub.s32 4, %v895
        %v897 = vrot.slane %v853, %v896
        %899 = vbcast.lane.b32.xlu0 %v897, 256
        %v900 = vpop.permute.xlu0 %899
        %v901 = vlaneseq
        %v902 = vshrl.u32 %v901, 7
        %v903 = vsub.s32 5, %v902
        %v904 = vrot.slane %v853, %v903
        %906 = vbcast.lane.b32.xlu0 %v904, 256
        %v907 = vpop.permute.xlu0 %906
        %v908 = vlaneseq
        %v909 = vshrl.u32 %v908, 7
        %v910 = vsub.s32 6, %v909
        %v911 = vrot.slane %v853, %v910
        %913 = vbcast.lane.b32.xlu0 %v911, 256
        %v914 = vpop.permute.xlu0 %913
        %v915 = vlaneseq
        %v916 = vshrl.u32 %v915, 7
        %v917 = vsub.s32 7, %v916
        %v918 = vrot.slane %v853, %v917
        %920 = vbcast.lane.b32.xlu0 %v918, 256
        %v921 = vpop.permute.xlu0 %920
        %v922 = vmul.f32 %v849, %v872
        %v923 = vmul.f32 %v858, %v879
        %v924 = vmul.f32 %v850, %v886
        %v925 = vmul.f32 %v859, %v893
        %v926 = vmul.f32 %v851, %v900
        %v927 = vmul.f32 %v860, %v907
        %v928 = vmul.f32 %v852, %v914
        %v929 = vmul.f32 %v861, %v921
        %vm930 = vcmask 257024
        %v931 = vsel %vm930, %v922, 0.0
        %v932 = vrot.slane %v931, 4
        %v933 = vadd.f32 %v931, %v932
        %v934 = vrot.slane %v933, 2
        %v935 = vadd.f32 %v933, %v934
        %v936 = vrot.slane %v935, 1
        %v937 = vadd.f32 %v935, %v936
        %v938 = vsel %vm930, %v923, 0.0
        %v939 = vrot.slane %v938, 4
        %v940 = vadd.f32 %v938, %v939
        %v941 = vrot.slane %v940, 2
        %v942 = vadd.f32 %v940, %v941
        %v943 = vrot.slane %v942, 1
        %v944 = vadd.f32 %v942, %v943
        %v945 = vsel %vm930, %v924, 0.0
        %v946 = vrot.slane %v945, 4
        %v947 = vadd.f32 %v945, %v946
        %v948 = vrot.slane %v947, 2
        %v949 = vadd.f32 %v947, %v948
        %v950 = vrot.slane %v949, 1
        %v951 = vadd.f32 %v949, %v950
        %v952 = vsel %vm930, %v925, 0.0
        %v953 = vrot.slane %v952, 4
        %v954 = vadd.f32 %v952, %v953
        %v955 = vrot.slane %v954, 2
        %v956 = vadd.f32 %v954, %v955
        %v957 = vrot.slane %v956, 1
        %v958 = vadd.f32 %v956, %v957
        %v959 = vsel %vm930, %v926, 0.0
        %v960 = vrot.slane %v959, 4
        %v961 = vadd.f32 %v959, %v960
        %v962 = vrot.slane %v961, 2
        %v963 = vadd.f32 %v961, %v962
        %v964 = vrot.slane %v963, 1
        %v965 = vadd.f32 %v963, %v964
        %v966 = vsel %vm930, %v927, 0.0
        %v967 = vrot.slane %v966, 4
        %v968 = vadd.f32 %v966, %v967
        %v969 = vrot.slane %v968, 2
        %v970 = vadd.f32 %v968, %v969
        %v971 = vrot.slane %v970, 1
        %v972 = vadd.f32 %v970, %v971
        %v973 = vsel %vm930, %v928, 0.0
        %v974 = vrot.slane %v973, 4
        %v975 = vadd.f32 %v973, %v974
        %v976 = vrot.slane %v975, 2
        %v977 = vadd.f32 %v975, %v976
        %v978 = vrot.slane %v977, 1
        %v979 = vadd.f32 %v977, %v978
        %v980 = vsel %vm930, %v929, 0.0
        %v981 = vrot.slane %v980, 4
        %v982 = vadd.f32 %v980, %v981
        %v983 = vrot.slane %v982, 2
        %v984 = vadd.f32 %v982, %v983
        %v985 = vrot.slane %v984, 1
        %v986 = vadd.f32 %v984, %v985
        %vm987 = vcmask 31744
        %v988 = vsel %vm987, %v853, 0.0
        %989 = vadd.xlane.f32.xlu0 %v988
        %v990 = vpop.xlane.xlu0 %989
        %v991 = vpack.c.bf16 %v937, %v937
        %v992 = vpack.c.bf16 %v944, %v944
        %v993 = vpack.c.bf16 %v951, %v951
        %v994 = vpack.c.bf16 %v958, %v958
        %v995 = vpack.c.bf16 %v965, %v965
        %v996 = vpack.c.bf16 %v972, %v972
        %v997 = vpack.c.bf16 %v979, %v979
        %v998 = vpack.c.bf16 %v986, %v986
        %v999 = vld [vmem:[%s8] sm:$0xf]
        %v1000 = vld [vmem:[%s8 + $0x4] sm:$0xf]
        %v1001 = vld [vmem:[%s8 + $0x8] sm:$0xf]
        %v1002 = vld [vmem:[%s8 + $0xc] sm:$0xf]
        %v1003 = vld [vmem:[%s9] sm:$0x1]
        %v1005 = vlaneseq
        %v1006 = vshrl.u32 %v1005, 7
        %v1007 = vsub.s32 0, %v1006
        %v1008 = vrot.slane %v1003, %v1007
        %v1010 = vmul.f32 %v1008, %v990
        %v1019 = vunpack.c.l.b16 %v991
        %v1020 = vunpack.c.l.b16 %v992
        %v1021 = vunpack.c.l.b16 %v993
        %v1022 = vunpack.c.l.b16 %v994
        %v1023 = vunpack.c.l.b16 %v995
        %v1024 = vunpack.c.l.b16 %v996
        %v1025 = vunpack.c.l.b16 %v997
        %v1026 = vunpack.c.l.b16 %v998
        %vm1027 = vcmask 1041409
        %v1028 = vsel %vm1027, %v1020, %v1019
        %vm1029 = vcmask 1042434
        %v1030 = vsel %vm1029, %v1021, %v1028
        %vm1031 = vcmask 1043459
        %v1032 = vsel %vm1031, %v1022, %v1030
        %vm1033 = vcmask 1044484
        %v1034 = vsel %vm1033, %v1023, %v1032
        %vm1035 = vcmask 1045509
        %v1036 = vsel %vm1035, %v1024, %v1034
        %vm1037 = vcmask 1046534
        %v1038 = vsel %vm1037, %v1025, %v1036
        %vm1039 = vcmask 1047559
        %v1040 = vsel %vm1039, %v1026, %v1038
        %v1041 = vpack.c.b16 %v1040, %v1040
        %v1046 = vunpack.c.l.b16 %v999
        %v1047 = vunpack.c.l.b16 %v1000
        %v1048 = vunpack.c.l.b16 %v1001
        %v1049 = vunpack.c.l.b16 %v1002
        %v1050 = vpack.c.b16 %v1047, %v1046
        %v1051 = vpack.c.b16 %v1049, %v1048
        %v1055 = vsel %vm474, %v1041, 0
        %1057 = vmatprep.subr.bf16.mxu0 0
        %1058 = vmatpush1.bf16.msra.mxu0 %v1050
        %1059 = vmatprep.subr.bf16.mxu0 0
        %1060 = vmatpush1.bf16.msra.mxu0 %v1051
        %1061 = vmatprep.subr.bf16.mxu0 0
        %1062 = vmatpush1.bf16.msra.mxu0 0
        %1063 = vmatprep.subr.bf16.mxu0 0
        %1064 = vmatpush1.bf16.msra.mxu0 0
        %1065 = vmatprep.subr.bf16.mxu0 0
        %1066 = vmatpush1.bf16.msra.mxu0 0
        %1067 = vmatprep.subr.bf16.mxu0 0
        %1068 = vmatpush1.bf16.msra.mxu0 0
        %1069 = vmatprep.subr.bf16.mxu0 0
        %1070 = vmatpush1.bf16.msra.mxu0 0
        %1071 = vmatprep.subr.bf16.mxu0 0
        %1072 = vmatpush1.bf16.msra.mxu0 0
        %1073 = vmatprep.subr.bf16.mxu0 0
        %1074 = vmatpush1.bf16.msra.mxu0 0
        %1075 = vmatprep.subr.bf16.mxu0 0
        %1076 = vmatpush1.bf16.msra.mxu0 0
        %1077 = vmatprep.subr.bf16.mxu0 0
        %1078 = vmatpush1.bf16.msra.mxu0 0
        %1079 = vmatprep.subr.bf16.mxu0 0
        %1080 = vmatpush1.bf16.msra.mxu0 0
        %1081 = vmatprep.subr.bf16.mxu0 0
        %1082 = vmatpush1.bf16.msra.mxu0 0
        %1083 = vmatprep.subr.bf16.mxu0 0
        %1084 = vmatpush1.bf16.msra.mxu0 0
        %1085 = vmatprep.subr.bf16.mxu0 0
        %1086 = vmatpush1.bf16.msra.mxu0 0
        %1087 = vmatprep.subr.bf16.mxu0 0
        %1088 = vmatpush1.bf16.msra.mxu0 0
        %1089 = vmatprep.mubr.bf16.mxu0 0
        %1090 = vmatmul.mubr.bf16.gmra.mrb[0].mxu0 %v1055
        %v1091 = vpop.f32.mrb[0].mxu0
        %v1092 = vadd.f32 %v1010, %v1091
        %v1093 = vpop.f32.mrb[0].mxu0
        %v1094 = vpop.f32.mrb[0].mxu0
        %v1095 = vpop.f32.mrb[0].mxu0
        %1096 = vdwg.mxu0
        %v1097 = vmul.f32 %v1092, 0.25
        %v1098 = vadd.f32 %v449, %v1097
        %v1099 = vsel %vm474, %v1098, 0.0
        %1100 = vadd.xlane.f32.xlu0 %v1099
        %v1101 = vpop.xlane.xlu0 %1100
        %v1102 = vrcp.pop 32.0
        %v1103 = vmul.f32 %v1101, %v1102
        %v1104 = vsub.f32 %v1098, %v1103
        %v1105 = vmul.f32 %v1104, %v1104
        %v1106 = vsel %vm474, %v1105, 0.0
        %1107 = vadd.xlane.f32.xlu0 %v1106
        %v1108 = vpop.xlane.xlu0 %1107
        %v1109 = vmul.f32 %v1108, 0.032258064
        %v1110 = vadd.f32 %v1109, 1e-06
        %v1111 = vrsqrt.pop %v1110
        %v1112 = vmul.f32 %v1110, %v1111
        %vm1113 = vcmp.eq.f32.partialorder %v1110, inf
        %v1114 = vsel %vm1113, %v1110, %v1112
        %vm1115 = vcmp.eq.f32.partialorder %v1110, 0.0
        %v1116 = vand.u32 %v1110, 2147483648
        %v1117 = vsel %vm1115, %v1116, %v1114
        %v1118 = vadd.f32 %v1117, 1e-06
        %v1119 = vrcp.pop %v1118
        %v1120 = vld [vmem:[%s10] sm:$0x1]
        %v1122 = vlaneseq
        %v1123 = vshrl.u32 %v1122, 7
        %v1124 = vsub.s32 0, %v1123
        %v1125 = vrot.slane %v1120, %v1124
        %v1127 = vmul.f32 %v1125, %v1104
        %v1128 = vmul.f32 %v1127, %v1119
        %v1129 = vld [vmem:[%s11] sm:$0x1]
        %v1131 = vlaneseq
        %v1132 = vshrl.u32 %v1131, 7
        %v1133 = vsub.s32 0, %v1132
        %v1134 = vrot.slane %v1129, %v1133
        %v1136 = vadd.f32 %v1128, %v1134
        %1137 = vst.msk [vmem:[%s433] sm:$0xff] %vm474, %v1136
        %s1138 = sand.u32 %s301, 1
        %s1139 = scalar_lea.sflag [#allocation3], %s1138
        %s1140 = sand.u32 %s301, 1
        %s1141 = smul.addr %s1140, 8
        %s1142 = scalar_lea.vmem [#allocation2], %s1141
        // Predicated region
        $region69: #{tpu_custom_call.1} parent=67 // pred_check
          %p1143 = pneg %p311
        $region70: #{tpu_custom_call.1} parent=67 // pred_check_branch
          %1145 = sbr.rel (%p1143) target = $region72
        $region71: #{tpu_custom_call.1} parent=67 // pred_region
          %s1147 = ssub.s32 128, 128
          %1148 = vsyncadd %s1139, %s1147
          %s1149 = smul.addr %s26, 128
          %s1150 = scalar_lea.hbm %s12, %s1149
          %s1152 = sshll.u32 %s1142, 4
          %s1153 = int_to_ptr.vmem [resolvable:$true] %s1152
          %1155 = dma.vmem_to_hbm [thread:$0]  %s1153, 128, %s1150, %s1139
        $region72: #{tpu_custom_call.1} parent=67 // pred_fallthru
          _
      $region68: #{tpu_custom_call.1} parent=5 // pred_fallthru
        _
      %p1156 = scmp.le.s32.totalorder 2, %s21
      // Predicated region
      $region73: #{tpu_custom_call.1} parent=5 // pred_check
        %p1157 = pneg %p1156
      $region74: #{tpu_custom_call.1} parent=5 // pred_check_branch
        %1159 = sbr.rel (%p1157) target = $region76
      $region75: #{tpu_custom_call.1} parent=5 // pred_region
        %s1160 = ssub.s32 %s21, 2
        // Predicated region
        $region77: #{tpu_custom_call.1} parent=75 // pred_check
          %p1161 = pneg %p317
        $region78: #{tpu_custom_call.1} parent=75 // pred_check_branch
          %1163 = sbr.rel (%p1161) target = $region80
        $region79: #{tpu_custom_call.1} parent=75 // pred_region
          %s1164 = sand.u32 %s302, 1
          %s1165 = scalar_lea.sflag [#allocation3], %s1164
          %s1166 = sand.u32 %s302, 1
          %s1167 = smul.addr %s1166, 8
          %s1168 = scalar_lea.vmem [#allocation2], %s1167
          %1169 = dma.done %s1165, 128
        $region80: #{tpu_custom_call.1} parent=75 // pred_fallthru
          _
      $region76: #{tpu_custom_call.1} parent=5 // pred_fallthru
        _
    $region6: #{tpu_custom_call.1} parent=1 // loop_footer
      %s25 = sadd.s32 1, %s21
    $region7: #{tpu_custom_call.1} parent=1 // loop_footer_branch
      %20 = sbr.rel target = $region3
    $region8: #{tpu_custom_call.1} parent=1 // loop_exit
      _
    %1170 = vsyncpa [#allocation3], 1
    %s1171 = scalar_lea.sflag [#allocation3], 1
    %1172 = vsyncpa %s1171, 1

</llo_original>
